<compile_context>
chip_gen: v7x
topology: tpu7x:2x2x1
jax: 0.10.0
libtpu: 0.0.40
codegen_flags: <defaults>
</compile_context>

<pallas_src>
import functools

import jax
import jax.numpy as jnp
from jax import lax
from jax.experimental import pallas as pl
from jax.experimental.pallas import tpu as pltpu


def make_filters(sx, sy, th, amplitude, w):
    """Reproduces Gaussian2DAnisotropic.get_filter -> weights of shape (F, w, w).

    weight[f, kh, kw] = amp[f] * exp(-(a[f]*coord[kh]^2
                                       + 2*b[f]*coord[kh]*coord[kw]
                                       + c[f]*coord[kw]^2))
    which matches the PyTorch xes/yes/xypod buffers followed by the
    .transpose(0, 2) performed before F.conv2d.
    """
    coord = jnp.arange(-(w // 2), w // 2 + 1, dtype=jnp.float32)  # (w,)
    sx = jnp.abs(sx)
    sy = jnp.abs(sy)
    a = jnp.cos(th) ** 2 * sx ** 2 / 2.0 + jnp.sin(th) ** 2 * sy ** 2 / 2.0
    b = -jnp.sin(2.0 * th) * sx ** 2 / 4.0 + jnp.sin(2.0 * th) * sy ** 2 / 4.0
    c = jnp.sin(th) ** 2 * sx ** 2 / 2.0 + jnp.cos(th) ** 2 * sy ** 2 / 2.0
    if amplitude is None:
        amplitude = 2.0 * (sx + sy)
    cy = coord[None, :, None]  # kh axis
    cx = coord[None, None, :]  # kw axis
    quad = (a[:, None, None] * cy ** 2
            + 2.0 * b[:, None, None] * cy * cx
            + c[:, None, None] * cx ** 2)
    return amplitude[:, None, None] * jnp.exp(-quad)  # (F, w, w)


def _grouped_gaussian_conv_kernel(x_ref, f_ref, o_ref, *, C, n_gaussian, H, W, KW):
    """One grid step = one batch image.

    x_ref: (1, C, H*W)   flattened (unpadded) input channels, lane dim = H*W
    f_ref: (F, KW*KW)    all filter taps, F = C * n_gaussian
    o_ref: (1, F, H*W)   flattened output channels (lane-dense stores)
    """
    p = KW // 2
    HW = H * W
    S = p * W + p                                # max |flat shift| over all taps
    F = C * n_gaussian

    # Load & cast once (hoisted out of the tap loop).
    x_c = x_ref[0].astype(jnp.float32)           # (C, HW)
    wmat = f_ref[...].astype(jnp.float32)        # (F, KW*KW), a single vector load

    # Replicate each input channel n_gaussian times along sublanes so that row
    # f of the slab pairs with filter row f (grouped conv: output channel f
    # reads input channel f // n_gaussian).
    rows = []
    for c in range(C):
        xc = x_c[c:c + 1]                        # (1, HW)
        rows.extend([xc] * n_gaussian)
    x_f = jnp.concatenate(rows, axis=0)          # (F, HW), fully dense sublanes

    # Zero halo on the flattened spatial axis: every tap then becomes an
    # in-bounds contiguous lane slice; taps whose source ROW falls outside
    # [0, H) land in the zeros automatically.
    zhalo = jnp.zeros((F, S), jnp.float32)
    x_pad = jnp.concatenate([zhalo, x_f, zhalo], axis=-1)   # (F, HW + 2*S)

    # Column-validity masks (one per kw): a flat shift by dw crosses image-row
    # boundaries, so contributions whose source COLUMN leaves [0, W) must be
    # zeroed.  Depends only on kw -> precompute KW masks once per step.
    col = lax.broadcasted_iota(jnp.int32, (1, HW), 1) % W
    col_masks = []
    for kw in range(KW):
        dw = kw - p
        col_masks.append((col + dw >= 0) & (col + dw < W))  # (1, HW) bool

    # Unrolled shift-multiply-accumulate over the KW*KW taps on (F, HW) slabs
    # (PyTorch conv2d is cross-correlation -> no kernel flip).  The MAC stays
    # on the VPU; the lane shifts lower to XLU rotate/select work.
    acc = jnp.zeros((F, HW), jnp.float32)
    for kh in range(KW):
        dh = kh - p
        for kw in range(KW):
            dw = kw - p
            start = S + dh * W + dw              # static, always >= 0
            tap = x_pad[:, start:start + HW]     # (F, HW) lane-dense slice
            tap = jnp.where(col_masks[kw], tap, 0.0)
            k = kh * KW + kw
            wcol = wmat[:, k:k + 1]              # (F, 1) in-register, no reload
            acc = acc + tap * wcol
    o_ref[0] = acc.astype(o_ref.dtype)


@functools.partial(jax.jit, static_argnames=("w", "n_gaussian"))
def gaussian2d_anisotropic_forward(x, sx, sy, th, amplitude, w, n_gaussian):
    """Forward pass of Gaussian2DAnisotropic: grouped conv with generated filters."""
    N, C, H, W = x.shape
    F = C * n_gaussian
    HW = H * W
    KK = w * w

    # Tiny elementwise filter construction stays in plain JAX (F scalars).
    weights = make_filters(sx, sy, th, amplitude, w)             # (F, w, w)
    wflat = weights.reshape(F, KK).astype(jnp.float32)

    # Free contiguous reshape; NO jnp.pad / extra HBM round trip of the input.
    x_flat = x.reshape(N, C, HW)

    kernel = functools.partial(
        _grouped_gaussian_conv_kernel,
        C=C, n_gaussian=n_gaussian, H=H, W=W, KW=w)

    out_flat = pl.pallas_call(
        kernel,
        out_shape=jax.ShapeDtypeStruct((N, F, HW), x.dtype),
        grid=(N,),
        in_specs=[
            # All channels of one image per grid step; spatial flattened into lanes.
            pl.BlockSpec((1, C, HW), lambda n: (n, 0, 0)),
            # All F * w * w filter taps as one small VMEM tile.
            pl.BlockSpec((F, KK), lambda n: (0, 0)),
        ],
        out_specs=pl.BlockSpec((1, F, HW), lambda n: (n, 0, 0)),
        compiler_params=pltpu.CompilerParams(
            # Batch steps are independent -> split across TensorCores on v7x.
            dimension_semantics=("parallel",),
            # Headroom for larger spatial blocks; harmless at these sizes
            # (<= default on v6e/v7x, above v5e's 16 MiB default).
            vmem_limit_bytes=32 * 1024 * 1024,
        ),
    )(x_flat, wflat)

    # Free contiguous reshape back to NCHW channel ordering f = c*n_gaussian + g.
    return out_flat.reshape(N, F, H, W)


if __name__ == "__main__":
    # Small deterministic problem: batch=2, in_channels=4, 16x16 spatial,
    # 5x5 Gaussian window, n_gaussian=2  =>  8 output channels.
    N, C, H, W = 2, 4, 16, 16
    w, n_gaussian = 5, 2
    F = C * n_gaussian

    key = jax.random.PRNGKey(0)
    k1, k2, k3, k4, k5 = jax.random.split(key, 5)
    x = jax.random.normal(k1, (N, C, H, W), dtype=jnp.float32)
    # Parameters (mirror torch.randn init in __init__; learn_amplitude=True).
    sx = jax.random.normal(k2, (F,), dtype=jnp.float32)
    sy = jax.random.normal(k3, (F,), dtype=jnp.float32)
    th = jax.random.normal(k4, (F,), dtype=jnp.float32)
    amplitude = jax.random.normal(k5, (F,), dtype=jnp.float32)

    out = gaussian2d_anisotropic_forward(
        x, sx, sy, th, amplitude, w=w, n_gaussian=n_gaussian)
    out = jax.block_until_ready(out)
    assert out.shape == (N, F, H, W)

    # Cross-check against XLA's grouped conv (same semantics as
    # F.conv2d(x, filt, padding=w//2, groups=C)).
    weights = make_filters(sx, sy, th, amplitude, w)
    ref = lax.conv_general_dilated(
        x, weights[:, None, :, :], window_strides=(1, 1),
        padding=[(w // 2, w // 2), (w // 2, w // 2)],
        dimension_numbers=("NCHW", "OIHW", "NCHW"),
        feature_group_count=C,
        precision=lax.Precision.HIGHEST)
    max_err = jnp.max(jnp.abs(out - ref))
    assert jnp.allclose(out, ref, atol=1e-4, rtol=1e-4), f"max err {max_err}"

    print("KERNEL_OK")
</pallas_src>

<mosaic_0001>
module attributes {stable_mosaic.version = 11 : i64} {
  func.func @_grouped_gaussian_conv_kernel(%arg0: i32, %arg1: memref<1x4x256xf32, #tpu.memory_space<vmem>>, %arg2: memref<8x25xf32, #tpu.memory_space<vmem>>, %arg3: memref<1x8x256xf32, #tpu.memory_space<vmem>>) attributes {dimension_semantics = [#tpu.dimension_semantics<parallel>], iteration_bounds = array<i64: 2>, scalar_prefetch = 0 : i64, scratch_operands = 0 : i64, tpu.core_type = #tpu.core_type<tc>, window_params = [{transform_indices = @transform_0, window_bounds = array<i64: 1, 4, 256>}, {pipeline_mode = #tpu.pipeline_mode<synchronous>, transform_indices = @transform_1, window_bounds = array<i64: 8, 25>}, {transform_indices = @transform_2, window_bounds = array<i64: 1, 8, 256>}]} {
    %c0 = arith.constant 0 : index
    %c0_0 = arith.constant 0 : index
    %c0_1 = arith.constant 0 : index
    %0 = vector.load %arg1[%c0, %c0_0, %c0_1] : memref<1x4x256xf32, #tpu.memory_space<vmem>>, vector<1x4x256xf32>
    %1 = vector.shape_cast %0 : vector<1x4x256xf32> to vector<4x256xf32>
    %c0_2 = arith.constant 0 : index
    %c0_3 = arith.constant 0 : index
    %2 = vector.load %arg2[%c0_2, %c0_3] : memref<8x25xf32, #tpu.memory_space<vmem>>, vector<8x25xf32>
    %3 = vector.extract_strided_slice %1 {offsets = [0, 0], sizes = [1, 256], strides = [1, 1]} : vector<4x256xf32> to vector<1x256xf32>
    %4 = vector.extract_strided_slice %1 {offsets = [1, 0], sizes = [1, 256], strides = [1, 1]} : vector<4x256xf32> to vector<1x256xf32>
    %5 = vector.extract_strided_slice %1 {offsets = [2, 0], sizes = [1, 256], strides = [1, 1]} : vector<4x256xf32> to vector<1x256xf32>
    %6 = vector.extract_strided_slice %1 {offsets = [3, 0], sizes = [1, 256], strides = [1, 1]} : vector<4x256xf32> to vector<1x256xf32>
    %7 = tpu.concatenate %3, %3, %4, %4, %5, %5, %6, %6 in 0 : vector<1x256xf32>, vector<1x256xf32>, vector<1x256xf32>, vector<1x256xf32>, vector<1x256xf32>, vector<1x256xf32>, vector<1x256xf32>, vector<1x256xf32> -> vector<8x256xf32>
    %cst = arith.constant 0.000000e+00 : f32
    %8 = vector.broadcast %cst : f32 to vector<8x34xf32>
    %9 = tpu.concatenate %8, %7, %8 in 1 : vector<8x34xf32>, vector<8x256xf32>, vector<8x34xf32> -> vector<8x324xf32>
    %10 = tpu.iota {dimensions = array<i32: 1>} : vector<1x256xi32>
    %c16_i32 = arith.constant 16 : i32
    %c0_i32 = arith.constant 0 : i32
    %11 = arith.cmpi eq, %c16_i32, %c0_i32 : i32
    %c1_i32 = arith.constant 1 : i32
    %12 = arith.select %11, %c1_i32, %c16_i32 : i32
    %13 = vector.broadcast %12 : i32 to vector<1x256xi32>
    %14 = arith.remsi %10, %13 : vector<1x256xi32>
    %c0_i32_4 = arith.constant 0 : i32
    %15 = vector.broadcast %c0_i32_4 : i32 to vector<1x256xi32>
    %16 = arith.cmpi ne, %14, %15 : vector<1x256xi32>
    %c0_i32_5 = arith.constant 0 : i32
    %17 = vector.broadcast %c0_i32_5 : i32 to vector<1x256xi32>
    %18 = arith.cmpi slt, %14, %17 : vector<1x256xi32>
    %c0_i32_6 = arith.constant 0 : i32
    %19 = arith.cmpi slt, %12, %c0_i32_6 : i32
    %20 = vector.broadcast %19 : i1 to vector<1x256xi1>
    %21 = vector.broadcast %20 : vector<1x256xi1> to vector<1x256xi1>
    %22 = arith.xori %18, %21 : vector<1x256xi1>
    %23 = arith.andi %22, %16 : vector<1x256xi1>
    %24 = vector.broadcast %12 : i32 to vector<1x256xi32>
    %25 = arith.addi %14, %24 : vector<1x256xi32>
    %26 = arith.select %23, %25, %14 : vector<1x256xi1>, vector<1x256xi32>
    %c-2_i32 = arith.constant -2 : i32
    %27 = vector.broadcast %c-2_i32 : i32 to vector<1x256xi32>
    %28 = arith.addi %26, %27 : vector<1x256xi32>
    %c0_i32_7 = arith.constant 0 : i32
    %29 = vector.broadcast %c0_i32_7 : i32 to vector<1x256xi32>
    %30 = arith.cmpi sge, %28, %29 : vector<1x256xi32>
    %c-2_i32_8 = arith.constant -2 : i32
    %31 = vector.broadcast %c-2_i32_8 : i32 to vector<1x256xi32>
    %32 = arith.addi %26, %31 : vector<1x256xi32>
    %c16_i32_9 = arith.constant 16 : i32
    %33 = vector.broadcast %c16_i32_9 : i32 to vector<1x256xi32>
    %34 = arith.cmpi slt, %32, %33 : vector<1x256xi32>
    %35 = arith.andi %30, %34 : vector<1x256xi1>
    %c-1_i32 = arith.constant -1 : i32
    %36 = vector.broadcast %c-1_i32 : i32 to vector<1x256xi32>
    %37 = arith.addi %26, %36 : vector<1x256xi32>
    %c0_i32_10 = arith.constant 0 : i32
    %38 = vector.broadcast %c0_i32_10 : i32 to vector<1x256xi32>
    %39 = arith.cmpi sge, %37, %38 : vector<1x256xi32>
    %c-1_i32_11 = arith.constant -1 : i32
    %40 = vector.broadcast %c-1_i32_11 : i32 to vector<1x256xi32>
    %41 = arith.addi %26, %40 : vector<1x256xi32>
    %c16_i32_12 = arith.constant 16 : i32
    %42 = vector.broadcast %c16_i32_12 : i32 to vector<1x256xi32>
    %43 = arith.cmpi slt, %41, %42 : vector<1x256xi32>
    %44 = arith.andi %39, %43 : vector<1x256xi1>
    %c0_i32_13 = arith.constant 0 : i32
    %45 = vector.broadcast %c0_i32_13 : i32 to vector<1x256xi32>
    %46 = arith.addi %26, %45 : vector<1x256xi32>
    %c0_i32_14 = arith.constant 0 : i32
    %47 = vector.broadcast %c0_i32_14 : i32 to vector<1x256xi32>
    %48 = arith.cmpi sge, %46, %47 : vector<1x256xi32>
    %c0_i32_15 = arith.constant 0 : i32
    %49 = vector.broadcast %c0_i32_15 : i32 to vector<1x256xi32>
    %50 = arith.addi %26, %49 : vector<1x256xi32>
    %c16_i32_16 = arith.constant 16 : i32
    %51 = vector.broadcast %c16_i32_16 : i32 to vector<1x256xi32>
    %52 = arith.cmpi slt, %50, %51 : vector<1x256xi32>
    %53 = arith.andi %48, %52 : vector<1x256xi1>
    %c1_i32_17 = arith.constant 1 : i32
    %54 = vector.broadcast %c1_i32_17 : i32 to vector<1x256xi32>
    %55 = arith.addi %26, %54 : vector<1x256xi32>
    %c0_i32_18 = arith.constant 0 : i32
    %56 = vector.broadcast %c0_i32_18 : i32 to vector<1x256xi32>
    %57 = arith.cmpi sge, %55, %56 : vector<1x256xi32>
    %c1_i32_19 = arith.constant 1 : i32
    %58 = vector.broadcast %c1_i32_19 : i32 to vector<1x256xi32>
    %59 = arith.addi %26, %58 : vector<1x256xi32>
    %c16_i32_20 = arith.constant 16 : i32
    %60 = vector.broadcast %c16_i32_20 : i32 to vector<1x256xi32>
    %61 = arith.cmpi slt, %59, %60 : vector<1x256xi32>
    %62 = arith.andi %57, %61 : vector<1x256xi1>
    %c2_i32 = arith.constant 2 : i32
    %63 = vector.broadcast %c2_i32 : i32 to vector<1x256xi32>
    %64 = arith.addi %26, %63 : vector<1x256xi32>
    %c0_i32_21 = arith.constant 0 : i32
    %65 = vector.broadcast %c0_i32_21 : i32 to vector<1x256xi32>
    %66 = arith.cmpi sge, %64, %65 : vector<1x256xi32>
    %c2_i32_22 = arith.constant 2 : i32
    %67 = vector.broadcast %c2_i32_22 : i32 to vector<1x256xi32>
    %68 = arith.addi %26, %67 : vector<1x256xi32>
    %c16_i32_23 = arith.constant 16 : i32
    %69 = vector.broadcast %c16_i32_23 : i32 to vector<1x256xi32>
    %70 = arith.cmpi slt, %68, %69 : vector<1x256xi32>
    %71 = arith.andi %66, %70 : vector<1x256xi1>
    %cst_24 = arith.constant 0.000000e+00 : f32
    %72 = vector.broadcast %cst_24 : f32 to vector<8x256xf32>
    %73 = vector.extract_strided_slice %9 {offsets = [0, 0], sizes = [8, 256], strides = [1, 1]} : vector<8x324xf32> to vector<8x256xf32>
    %cst_25 = arith.constant 0.000000e+00 : f32
    %74 = vector.shape_cast %35 : vector<1x256xi1> to vector<1x256xi1>
    %75 = vector.broadcast %74 : vector<1x256xi1> to vector<8x256xi1>
    %76 = vector.broadcast %cst_25 : f32 to vector<8x256xf32>
    %77 = arith.select %75, %73, %76 : vector<8x256xi1>, vector<8x256xf32>
    %78 = vector.extract_strided_slice %2 {offsets = [0, 0], sizes = [8, 1], strides = [1, 1]} : vector<8x25xf32> to vector<8x1xf32>
    %79 = vector.broadcast %78 : vector<8x1xf32> to vector<8x256xf32>
    %80 = arith.mulf %77, %79 : vector<8x256xf32>
    %81 = arith.addf %72, %80 : vector<8x256xf32>
    %82 = vector.extract_strided_slice %9 {offsets = [0, 1], sizes = [8, 256], strides = [1, 1]} : vector<8x324xf32> to vector<8x256xf32>
    %cst_26 = arith.constant 0.000000e+00 : f32
    %83 = vector.shape_cast %44 : vector<1x256xi1> to vector<1x256xi1>
    %84 = vector.broadcast %83 : vector<1x256xi1> to vector<8x256xi1>
    %85 = vector.broadcast %cst_26 : f32 to vector<8x256xf32>
    %86 = arith.select %84, %82, %85 : vector<8x256xi1>, vector<8x256xf32>
    %87 = vector.extract_strided_slice %2 {offsets = [0, 1], sizes = [8, 1], strides = [1, 1]} : vector<8x25xf32> to vector<8x1xf32>
    %88 = vector.broadcast %87 : vector<8x1xf32> to vector<8x256xf32>
    %89 = arith.mulf %86, %88 : vector<8x256xf32>
    %90 = arith.addf %81, %89 : vector<8x256xf32>
    %91 = vector.extract_strided_slice %9 {offsets = [0, 2], sizes = [8, 256], strides = [1, 1]} : vector<8x324xf32> to vector<8x256xf32>
    %cst_27 = arith.constant 0.000000e+00 : f32
    %92 = vector.shape_cast %53 : vector<1x256xi1> to vector<1x256xi1>
    %93 = vector.broadcast %92 : vector<1x256xi1> to vector<8x256xi1>
    %94 = vector.broadcast %cst_27 : f32 to vector<8x256xf32>
    %95 = arith.select %93, %91, %94 : vector<8x256xi1>, vector<8x256xf32>
    %96 = vector.extract_strided_slice %2 {offsets = [0, 2], sizes = [8, 1], strides = [1, 1]} : vector<8x25xf32> to vector<8x1xf32>
    %97 = vector.broadcast %96 : vector<8x1xf32> to vector<8x256xf32>
    %98 = arith.mulf %95, %97 : vector<8x256xf32>
    %99 = arith.addf %90, %98 : vector<8x256xf32>
    %100 = vector.extract_strided_slice %9 {offsets = [0, 3], sizes = [8, 256], strides = [1, 1]} : vector<8x324xf32> to vector<8x256xf32>
    %cst_28 = arith.constant 0.000000e+00 : f32
    %101 = vector.shape_cast %62 : vector<1x256xi1> to vector<1x256xi1>
    %102 = vector.broadcast %101 : vector<1x256xi1> to vector<8x256xi1>
    %103 = vector.broadcast %cst_28 : f32 to vector<8x256xf32>
    %104 = arith.select %102, %100, %103 : vector<8x256xi1>, vector<8x256xf32>
    %105 = vector.extract_strided_slice %2 {offsets = [0, 3], sizes = [8, 1], strides = [1, 1]} : vector<8x25xf32> to vector<8x1xf32>
    %106 = vector.broadcast %105 : vector<8x1xf32> to vector<8x256xf32>
    %107 = arith.mulf %104, %106 : vector<8x256xf32>
    %108 = arith.addf %99, %107 : vector<8x256xf32>
    %109 = vector.extract_strided_slice %9 {offsets = [0, 4], sizes = [8, 256], strides = [1, 1]} : vector<8x324xf32> to vector<8x256xf32>
    %cst_29 = arith.constant 0.000000e+00 : f32
    %110 = vector.shape_cast %71 : vector<1x256xi1> to vector<1x256xi1>
    %111 = vector.broadcast %110 : vector<1x256xi1> to vector<8x256xi1>
    %112 = vector.broadcast %cst_29 : f32 to vector<8x256xf32>
    %113 = arith.select %111, %109, %112 : vector<8x256xi1>, vector<8x256xf32>
    %114 = vector.extract_strided_slice %2 {offsets = [0, 4], sizes = [8, 1], strides = [1, 1]} : vector<8x25xf32> to vector<8x1xf32>
    %115 = vector.broadcast %114 : vector<8x1xf32> to vector<8x256xf32>
    %116 = arith.mulf %113, %115 : vector<8x256xf32>
    %117 = arith.addf %108, %116 : vector<8x256xf32>
    %118 = vector.extract_strided_slice %9 {offsets = [0, 16], sizes = [8, 256], strides = [1, 1]} : vector<8x324xf32> to vector<8x256xf32>
    %cst_30 = arith.constant 0.000000e+00 : f32
    %119 = vector.shape_cast %35 : vector<1x256xi1> to vector<1x256xi1>
    %120 = vector.broadcast %119 : vector<1x256xi1> to vector<8x256xi1>
    %121 = vector.broadcast %cst_30 : f32 to vector<8x256xf32>
    %122 = arith.select %120, %118, %121 : vector<8x256xi1>, vector<8x256xf32>
    %123 = vector.extract_strided_slice %2 {offsets = [0, 5], sizes = [8, 1], strides = [1, 1]} : vector<8x25xf32> to vector<8x1xf32>
    %124 = vector.broadcast %123 : vector<8x1xf32> to vector<8x256xf32>
    %125 = arith.mulf %122, %124 : vector<8x256xf32>
    %126 = arith.addf %117, %125 : vector<8x256xf32>
    %127 = vector.extract_strided_slice %9 {offsets = [0, 17], sizes = [8, 256], strides = [1, 1]} : vector<8x324xf32> to vector<8x256xf32>
    %cst_31 = arith.constant 0.000000e+00 : f32
    %128 = vector.shape_cast %44 : vector<1x256xi1> to vector<1x256xi1>
    %129 = vector.broadcast %128 : vector<1x256xi1> to vector<8x256xi1>
    %130 = vector.broadcast %cst_31 : f32 to vector<8x256xf32>
    %131 = arith.select %129, %127, %130 : vector<8x256xi1>, vector<8x256xf32>
    %132 = vector.extract_strided_slice %2 {offsets = [0, 6], sizes = [8, 1], strides = [1, 1]} : vector<8x25xf32> to vector<8x1xf32>
    %133 = vector.broadcast %132 : vector<8x1xf32> to vector<8x256xf32>
    %134 = arith.mulf %131, %133 : vector<8x256xf32>
    %135 = arith.addf %126, %134 : vector<8x256xf32>
    %136 = vector.extract_strided_slice %9 {offsets = [0, 18], sizes = [8, 256], strides = [1, 1]} : vector<8x324xf32> to vector<8x256xf32>
    %cst_32 = arith.constant 0.000000e+00 : f32
    %137 = vector.shape_cast %53 : vector<1x256xi1> to vector<1x256xi1>
    %138 = vector.broadcast %137 : vector<1x256xi1> to vector<8x256xi1>
    %139 = vector.broadcast %cst_32 : f32 to vector<8x256xf32>
    %140 = arith.select %138, %136, %139 : vector<8x256xi1>, vector<8x256xf32>
    %141 = vector.extract_strided_slice %2 {offsets = [0, 7], sizes = [8, 1], strides = [1, 1]} : vector<8x25xf32> to vector<8x1xf32>
    %142 = vector.broadcast %141 : vector<8x1xf32> to vector<8x256xf32>
    %143 = arith.mulf %140, %142 : vector<8x256xf32>
    %144 = arith.addf %135, %143 : vector<8x256xf32>
    %145 = vector.extract_strided_slice %9 {offsets = [0, 19], sizes = [8, 256], strides = [1, 1]} : vector<8x324xf32> to vector<8x256xf32>
    %cst_33 = arith.constant 0.000000e+00 : f32
    %146 = vector.shape_cast %62 : vector<1x256xi1> to vector<1x256xi1>
    %147 = vector.broadcast %146 : vector<1x256xi1> to vector<8x256xi1>
    %148 = vector.broadcast %cst_33 : f32 to vector<8x256xf32>
    %149 = arith.select %147, %145, %148 : vector<8x256xi1>, vector<8x256xf32>
    %150 = vector.extract_strided_slice %2 {offsets = [0, 8], sizes = [8, 1], strides = [1, 1]} : vector<8x25xf32> to vector<8x1xf32>
    %151 = vector.broadcast %150 : vector<8x1xf32> to vector<8x256xf32>
    %152 = arith.mulf %149, %151 : vector<8x256xf32>
    %153 = arith.addf %144, %152 : vector<8x256xf32>
    %154 = vector.extract_strided_slice %9 {offsets = [0, 20], sizes = [8, 256], strides = [1, 1]} : vector<8x324xf32> to vector<8x256xf32>
    %cst_34 = arith.constant 0.000000e+00 : f32
    %155 = vector.shape_cast %71 : vector<1x256xi1> to vector<1x256xi1>
    %156 = vector.broadcast %155 : vector<1x256xi1> to vector<8x256xi1>
    %157 = vector.broadcast %cst_34 : f32 to vector<8x256xf32>
    %158 = arith.select %156, %154, %157 : vector<8x256xi1>, vector<8x256xf32>
    %159 = vector.extract_strided_slice %2 {offsets = [0, 9], sizes = [8, 1], strides = [1, 1]} : vector<8x25xf32> to vector<8x1xf32>
    %160 = vector.broadcast %159 : vector<8x1xf32> to vector<8x256xf32>
    %161 = arith.mulf %158, %160 : vector<8x256xf32>
    %162 = arith.addf %153, %161 : vector<8x256xf32>
    %163 = vector.extract_strided_slice %9 {offsets = [0, 32], sizes = [8, 256], strides = [1, 1]} : vector<8x324xf32> to vector<8x256xf32>
    %cst_35 = arith.constant 0.000000e+00 : f32
    %164 = vector.shape_cast %35 : vector<1x256xi1> to vector<1x256xi1>
    %165 = vector.broadcast %164 : vector<1x256xi1> to vector<8x256xi1>
    %166 = vector.broadcast %cst_35 : f32 to vector<8x256xf32>
    %167 = arith.select %165, %163, %166 : vector<8x256xi1>, vector<8x256xf32>
    %168 = vector.extract_strided_slice %2 {offsets = [0, 10], sizes = [8, 1], strides = [1, 1]} : vector<8x25xf32> to vector<8x1xf32>
    %169 = vector.broadcast %168 : vector<8x1xf32> to vector<8x256xf32>
    %170 = arith.mulf %167, %169 : vector<8x256xf32>
    %171 = arith.addf %162, %170 : vector<8x256xf32>
    %172 = vector.extract_strided_slice %9 {offsets = [0, 33], sizes = [8, 256], strides = [1, 1]} : vector<8x324xf32> to vector<8x256xf32>
    %cst_36 = arith.constant 0.000000e+00 : f32
    %173 = vector.shape_cast %44 : vector<1x256xi1> to vector<1x256xi1>
    %174 = vector.broadcast %173 : vector<1x256xi1> to vector<8x256xi1>
    %175 = vector.broadcast %cst_36 : f32 to vector<8x256xf32>
    %176 = arith.select %174, %172, %175 : vector<8x256xi1>, vector<8x256xf32>
    %177 = vector.extract_strided_slice %2 {offsets = [0, 11], sizes = [8, 1], strides = [1, 1]} : vector<8x25xf32> to vector<8x1xf32>
    %178 = vector.broadcast %177 : vector<8x1xf32> to vector<8x256xf32>
    %179 = arith.mulf %176, %178 : vector<8x256xf32>
    %180 = arith.addf %171, %179 : vector<8x256xf32>
    %181 = vector.extract_strided_slice %9 {offsets = [0, 34], sizes = [8, 256], strides = [1, 1]} : vector<8x324xf32> to vector<8x256xf32>
    %cst_37 = arith.constant 0.000000e+00 : f32
    %182 = vector.shape_cast %53 : vector<1x256xi1> to vector<1x256xi1>
    %183 = vector.broadcast %182 : vector<1x256xi1> to vector<8x256xi1>
    %184 = vector.broadcast %cst_37 : f32 to vector<8x256xf32>
    %185 = arith.select %183, %181, %184 : vector<8x256xi1>, vector<8x256xf32>
    %186 = vector.extract_strided_slice %2 {offsets = [0, 12], sizes = [8, 1], strides = [1, 1]} : vector<8x25xf32> to vector<8x1xf32>
    %187 = vector.broadcast %186 : vector<8x1xf32> to vector<8x256xf32>
    %188 = arith.mulf %185, %187 : vector<8x256xf32>
    %189 = arith.addf %180, %188 : vector<8x256xf32>
    %190 = vector.extract_strided_slice %9 {offsets = [0, 35], sizes = [8, 256], strides = [1, 1]} : vector<8x324xf32> to vector<8x256xf32>
    %cst_38 = arith.constant 0.000000e+00 : f32
    %191 = vector.shape_cast %62 : vector<1x256xi1> to vector<1x256xi1>
    %192 = vector.broadcast %191 : vector<1x256xi1> to vector<8x256xi1>
    %193 = vector.broadcast %cst_38 : f32 to vector<8x256xf32>
    %194 = arith.select %192, %190, %193 : vector<8x256xi1>, vector<8x256xf32>
    %195 = vector.extract_strided_slice %2 {offsets = [0, 13], sizes = [8, 1], strides = [1, 1]} : vector<8x25xf32> to vector<8x1xf32>
    %196 = vector.broadcast %195 : vector<8x1xf32> to vector<8x256xf32>
    %197 = arith.mulf %194, %196 : vector<8x256xf32>
    %198 = arith.addf %189, %197 : vector<8x256xf32>
    %199 = vector.extract_strided_slice %9 {offsets = [0, 36], sizes = [8, 256], strides = [1, 1]} : vector<8x324xf32> to vector<8x256xf32>
    %cst_39 = arith.constant 0.000000e+00 : f32
    %200 = vector.shape_cast %71 : vector<1x256xi1> to vector<1x256xi1>
    %201 = vector.broadcast %200 : vector<1x256xi1> to vector<8x256xi1>
    %202 = vector.broadcast %cst_39 : f32 to vector<8x256xf32>
    %203 = arith.select %201, %199, %202 : vector<8x256xi1>, vector<8x256xf32>
    %204 = vector.extract_strided_slice %2 {offsets = [0, 14], sizes = [8, 1], strides = [1, 1]} : vector<8x25xf32> to vector<8x1xf32>
    %205 = vector.broadcast %204 : vector<8x1xf32> to vector<8x256xf32>
    %206 = arith.mulf %203, %205 : vector<8x256xf32>
    %207 = arith.addf %198, %206 : vector<8x256xf32>
    %208 = vector.extract_strided_slice %9 {offsets = [0, 48], sizes = [8, 256], strides = [1, 1]} : vector<8x324xf32> to vector<8x256xf32>
    %cst_40 = arith.constant 0.000000e+00 : f32
    %209 = vector.shape_cast %35 : vector<1x256xi1> to vector<1x256xi1>
    %210 = vector.broadcast %209 : vector<1x256xi1> to vector<8x256xi1>
    %211 = vector.broadcast %cst_40 : f32 to vector<8x256xf32>
    %212 = arith.select %210, %208, %211 : vector<8x256xi1>, vector<8x256xf32>
    %213 = vector.extract_strided_slice %2 {offsets = [0, 15], sizes = [8, 1], strides = [1, 1]} : vector<8x25xf32> to vector<8x1xf32>
    %214 = vector.broadcast %213 : vector<8x1xf32> to vector<8x256xf32>
    %215 = arith.mulf %212, %214 : vector<8x256xf32>
    %216 = arith.addf %207, %215 : vector<8x256xf32>
    %217 = vector.extract_strided_slice %9 {offsets = [0, 49], sizes = [8, 256], strides = [1, 1]} : vector<8x324xf32> to vector<8x256xf32>
    %cst_41 = arith.constant 0.000000e+00 : f32
    %218 = vector.shape_cast %44 : vector<1x256xi1> to vector<1x256xi1>
    %219 = vector.broadcast %218 : vector<1x256xi1> to vector<8x256xi1>
    %220 = vector.broadcast %cst_41 : f32 to vector<8x256xf32>
    %221 = arith.select %219, %217, %220 : vector<8x256xi1>, vector<8x256xf32>
    %222 = vector.extract_strided_slice %2 {offsets = [0, 16], sizes = [8, 1], strides = [1, 1]} : vector<8x25xf32> to vector<8x1xf32>
    %223 = vector.broadcast %222 : vector<8x1xf32> to vector<8x256xf32>
    %224 = arith.mulf %221, %223 : vector<8x256xf32>
    %225 = arith.addf %216, %224 : vector<8x256xf32>
    %226 = vector.extract_strided_slice %9 {offsets = [0, 50], sizes = [8, 256], strides = [1, 1]} : vector<8x324xf32> to vector<8x256xf32>
    %cst_42 = arith.constant 0.000000e+00 : f32
    %227 = vector.shape_cast %53 : vector<1x256xi1> to vector<1x256xi1>
    %228 = vector.broadcast %227 : vector<1x256xi1> to vector<8x256xi1>
    %229 = vector.broadcast %cst_42 : f32 to vector<8x256xf32>
    %230 = arith.select %228, %226, %229 : vector<8x256xi1>, vector<8x256xf32>
    %231 = vector.extract_strided_slice %2 {offsets = [0, 17], sizes = [8, 1], strides = [1, 1]} : vector<8x25xf32> to vector<8x1xf32>
    %232 = vector.broadcast %231 : vector<8x1xf32> to vector<8x256xf32>
    %233 = arith.mulf %230, %232 : vector<8x256xf32>
    %234 = arith.addf %225, %233 : vector<8x256xf32>
    %235 = vector.extract_strided_slice %9 {offsets = [0, 51], sizes = [8, 256], strides = [1, 1]} : vector<8x324xf32> to vector<8x256xf32>
    %cst_43 = arith.constant 0.000000e+00 : f32
    %236 = vector.shape_cast %62 : vector<1x256xi1> to vector<1x256xi1>
    %237 = vector.broadcast %236 : vector<1x256xi1> to vector<8x256xi1>
    %238 = vector.broadcast %cst_43 : f32 to vector<8x256xf32>
    %239 = arith.select %237, %235, %238 : vector<8x256xi1>, vector<8x256xf32>
    %240 = vector.extract_strided_slice %2 {offsets = [0, 18], sizes = [8, 1], strides = [1, 1]} : vector<8x25xf32> to vector<8x1xf32>
    %241 = vector.broadcast %240 : vector<8x1xf32> to vector<8x256xf32>
    %242 = arith.mulf %239, %241 : vector<8x256xf32>
    %243 = arith.addf %234, %242 : vector<8x256xf32>
    %244 = vector.extract_strided_slice %9 {offsets = [0, 52], sizes = [8, 256], strides = [1, 1]} : vector<8x324xf32> to vector<8x256xf32>
    %cst_44 = arith.constant 0.000000e+00 : f32
    %245 = vector.shape_cast %71 : vector<1x256xi1> to vector<1x256xi1>
    %246 = vector.broadcast %245 : vector<1x256xi1> to vector<8x256xi1>
    %247 = vector.broadcast %cst_44 : f32 to vector<8x256xf32>
    %248 = arith.select %246, %244, %247 : vector<8x256xi1>, vector<8x256xf32>
    %249 = vector.extract_strided_slice %2 {offsets = [0, 19], sizes = [8, 1], strides = [1, 1]} : vector<8x25xf32> to vector<8x1xf32>
    %250 = vector.broadcast %249 : vector<8x1xf32> to vector<8x256xf32>
    %251 = arith.mulf %248, %250 : vector<8x256xf32>
    %252 = arith.addf %243, %251 : vector<8x256xf32>
    %253 = vector.extract_strided_slice %9 {offsets = [0, 64], sizes = [8, 256], strides = [1, 1]} : vector<8x324xf32> to vector<8x256xf32>
    %cst_45 = arith.constant 0.000000e+00 : f32
    %254 = vector.shape_cast %35 : vector<1x256xi1> to vector<1x256xi1>
    %255 = vector.broadcast %254 : vector<1x256xi1> to vector<8x256xi1>
    %256 = vector.broadcast %cst_45 : f32 to vector<8x256xf32>
    %257 = arith.select %255, %253, %256 : vector<8x256xi1>, vector<8x256xf32>
    %258 = vector.extract_strided_slice %2 {offsets = [0, 20], sizes = [8, 1], strides = [1, 1]} : vector<8x25xf32> to vector<8x1xf32>
    %259 = vector.broadcast %258 : vector<8x1xf32> to vector<8x256xf32>
    %260 = arith.mulf %257, %259 : vector<8x256xf32>
    %261 = arith.addf %252, %260 : vector<8x256xf32>
    %262 = vector.extract_strided_slice %9 {offsets = [0, 65], sizes = [8, 256], strides = [1, 1]} : vector<8x324xf32> to vector<8x256xf32>
    %cst_46 = arith.constant 0.000000e+00 : f32
    %263 = vector.shape_cast %44 : vector<1x256xi1> to vector<1x256xi1>
    %264 = vector.broadcast %263 : vector<1x256xi1> to vector<8x256xi1>
    %265 = vector.broadcast %cst_46 : f32 to vector<8x256xf32>
    %266 = arith.select %264, %262, %265 : vector<8x256xi1>, vector<8x256xf32>
    %267 = vector.extract_strided_slice %2 {offsets = [0, 21], sizes = [8, 1], strides = [1, 1]} : vector<8x25xf32> to vector<8x1xf32>
    %268 = vector.broadcast %267 : vector<8x1xf32> to vector<8x256xf32>
    %269 = arith.mulf %266, %268 : vector<8x256xf32>
    %270 = arith.addf %261, %269 : vector<8x256xf32>
    %271 = vector.extract_strided_slice %9 {offsets = [0, 66], sizes = [8, 256], strides = [1, 1]} : vector<8x324xf32> to vector<8x256xf32>
    %cst_47 = arith.constant 0.000000e+00 : f32
    %272 = vector.shape_cast %53 : vector<1x256xi1> to vector<1x256xi1>
    %273 = vector.broadcast %272 : vector<1x256xi1> to vector<8x256xi1>
    %274 = vector.broadcast %cst_47 : f32 to vector<8x256xf32>
    %275 = arith.select %273, %271, %274 : vector<8x256xi1>, vector<8x256xf32>
    %276 = vector.extract_strided_slice %2 {offsets = [0, 22], sizes = [8, 1], strides = [1, 1]} : vector<8x25xf32> to vector<8x1xf32>
    %277 = vector.broadcast %276 : vector<8x1xf32> to vector<8x256xf32>
    %278 = arith.mulf %275, %277 : vector<8x256xf32>
    %279 = arith.addf %270, %278 : vector<8x256xf32>
    %280 = vector.extract_strided_slice %9 {offsets = [0, 67], sizes = [8, 256], strides = [1, 1]} : vector<8x324xf32> to vector<8x256xf32>
    %cst_48 = arith.constant 0.000000e+00 : f32
    %281 = vector.shape_cast %62 : vector<1x256xi1> to vector<1x256xi1>
    %282 = vector.broadcast %281 : vector<1x256xi1> to vector<8x256xi1>
    %283 = vector.broadcast %cst_48 : f32 to vector<8x256xf32>
    %284 = arith.select %282, %280, %283 : vector<8x256xi1>, vector<8x256xf32>
    %285 = vector.extract_strided_slice %2 {offsets = [0, 23], sizes = [8, 1], strides = [1, 1]} : vector<8x25xf32> to vector<8x1xf32>
    %286 = vector.broadcast %285 : vector<8x1xf32> to vector<8x256xf32>
    %287 = arith.mulf %284, %286 : vector<8x256xf32>
    %288 = arith.addf %279, %287 : vector<8x256xf32>
    %289 = vector.extract_strided_slice %9 {offsets = [0, 68], sizes = [8, 256], strides = [1, 1]} : vector<8x324xf32> to vector<8x256xf32>
    %cst_49 = arith.constant 0.000000e+00 : f32
    %290 = vector.shape_cast %71 : vector<1x256xi1> to vector<1x256xi1>
    %291 = vector.broadcast %290 : vector<1x256xi1> to vector<8x256xi1>
    %292 = vector.broadcast %cst_49 : f32 to vector<8x256xf32>
    %293 = arith.select %291, %289, %292 : vector<8x256xi1>, vector<8x256xf32>
    %294 = vector.extract_strided_slice %2 {offsets = [0, 24], sizes = [8, 1], strides = [1, 1]} : vector<8x25xf32> to vector<8x1xf32>
    %295 = vector.broadcast %294 : vector<8x1xf32> to vector<8x256xf32>
    %296 = arith.mulf %293, %295 : vector<8x256xf32>
    %297 = arith.addf %288, %296 : vector<8x256xf32>
    %c0_50 = arith.constant 0 : index
    %c0_51 = arith.constant 0 : index
    %c0_52 = arith.constant 0 : index
    %298 = vector.load %arg3[%c0_50, %c0_51, %c0_52] : memref<1x8x256xf32, #tpu.memory_space<vmem>>, vector<1x8x256xf32>
    %299 = vector.shape_cast %298 : vector<1x8x256xf32> to vector<8x256xf32>
    %300 = vector.shape_cast %297 : vector<8x256xf32> to vector<1x8x256xf32>
    tpu.vector_store %arg3[%c0_50, %c0_51, %c0_52], %300 {strides = array<i32>} : memref<1x8x256xf32, #tpu.memory_space<vmem>>, vector<1x8x256xf32>,
    return
  }
  func.func @transform_0(%arg0: i32) -> (i32, i32, i32) {
    %c0_i32 = arith.constant 0 : i32
    %c0_i32_0 = arith.constant 0 : i32
    %c0_i32_1 = arith.constant 0 : i32
    return %arg0, %c0_i32, %c0_i32_0 : i32, i32, i32
  }
  func.func @transform_1(%arg0: i32) -> (i32, i32) {
    %c0_i32 = arith.constant 0 : i32
    %c0_i32_0 = arith.constant 0 : i32
    %c0_i32_1 = arith.constant 0 : i32
    return %c0_i32, %c0_i32_0 : i32, i32
  }
  func.func @transform_2(%arg0: i32) -> (i32, i32, i32) {
    %c0_i32 = arith.constant 0 : i32
    %c0_i32_0 = arith.constant 0 : i32
    %c0_i32_1 = arith.constant 0 : i32
    return %arg0, %c0_i32, %c0_i32_0 : i32, i32, i32
  }
}

</mosaic_0001>

<llo_original>
// kernel: gaussian2d_anisotropic_forward.1
$region0: #{gaussian2d_anisotropic_forward.1}
  #allocation0 [shape = 'u32[]', space=smem, size = 0x4, offset = 0x4, fixed_abs, tag = 'smem constant byte address 0x4 - core index']
  #allocation1 [shape = 'u32[144,128]{1,0:T(1,128)}', space=vmem, size = 0x12000, scoped, tag = 'internal scratch']
  %s0 = inlined_call_operand.vmem [shape: f32[2,4,256], index: 0, kind: input, shape index: {}]
  %s1 = inlined_call_operand.vmem [shape: f32[8,25], index: 1, kind: input, shape index: {}]
  %s2 = inlined_call_operand.vmem [shape: f32[2,8,256], index: 2, kind: output, shape index: {}]
  %s3 = sld [smem:[#allocation0]]
  $region41: #{gaussian2d_anisotropic_forward.1} parent=0
    _
  %s5 = ssub.s32 1, %s3
  %s6 = scalar_select 0, %s5, %s3
  loop: start=0, step=1, limit=4
  $region2: #{gaussian2d_anisotropic_forward.1} parent=0 // loop_pre_header
    _
  $region3: #{gaussian2d_anisotropic_forward.1} parent=0 // loop_header
    %s8 = sphi 0, %s12
    %p9 = scmp.ge.s32.totalorder %s8, 4
    %s18 = sphi 0, %s20
    %s21 = sphi 0, %s18
    %s22 = sphi 0, %s21
    %s38 = sphi 0, %s22
    %s42 = sphi 0, %s42
    %s44 = sphi 0, %s42
    %s45 = sphi 0, %s44
    %s59 = sphi 0, %s45
    %s65 = sphi 0, %s67
    %s68 = sphi 0, %s65
    %s69 = sphi 0, %s68
    %s85 = sphi 0, %s69
  $region4: #{gaussian2d_anisotropic_forward.1} parent=0 // loop_header_branch
    %11 = sbr.rel (%p9) target = $region8
  $region5: #{gaussian2d_anisotropic_forward.1} parent=0 // loop_body
    %s13 = ssub.s32 %s8, 1
    %s14 = ssub.s32 %s8, 2
    %s15 = sadd.s32 %s8, 1
    %s16 = ssub.s32 %s8, %s15
    %p17 = scmp.eq.s32.totalorder %s16, 0
    %s19 = sadd.s32 %s18, 1
    %s20 = scalar_select %p17, %s18, %s19
    %p23 = pneg %p17
    %p24 = scmp.eq.s32.totalorder %s8, 1
    %p25 = por %p23, %p24
    %p26 = scmp.ne.s32.totalorder %s18, %s21
    %p27 = scmp.eq.s32.totalorder %s8, 0
    %p28 = por %p26, %p27
    %p29 = scmp.ne.s32.totalorder %s18, %s21
    %p30 = scmp.eq.s32.totalorder %s13, 1
    %p31 = por %p29, %p30
    %p32 = scmp.ne.s32.totalorder %s21, %s22
    %p33 = scmp.eq.s32.totalorder %s13, 0
    %p34 = por %p32, %p33
    %p35 = scmp.ne.s32.totalorder %s21, %s22
    %p36 = scmp.eq.s32.totalorder %s14, 1
    %p37 = por %p35, %p36
    %p39 = scmp.ne.s32.totalorder %s22, %s38
    %p40 = scmp.eq.s32.totalorder %s14, 0
    %p41 = por %p39, %p40
    %s43 = sadd.s32 %s42, 1
    %p46 = scmp.eq.s32.totalorder %s8, 1
    %p47 = scmp.ne.s32.totalorder %s42, %s44
    %p48 = scmp.eq.s32.totalorder %s8, 0
    %p49 = por %p47, %p48
    %p50 = scmp.ne.s32.totalorder %s42, %s44
    %p51 = scmp.eq.s32.totalorder %s13, 1
    %p52 = por %p50, %p51
    %p53 = scmp.ne.s32.totalorder %s44, %s45
    %p54 = scmp.eq.s32.totalorder %s13, 0
    %p55 = por %p53, %p54
    %p56 = scmp.ne.s32.totalorder %s44, %s45
    %p57 = scmp.eq.s32.totalorder %s14, 1
    %p58 = por %p56, %p57
    %p60 = scmp.ne.s32.totalorder %s45, %s59
    %p61 = scmp.eq.s32.totalorder %s14, 0
    %p62 = por %p60, %p61
    %s63 = ssub.s32 %s8, %s15
    %p64 = scmp.eq.s32.totalorder %s63, 0
    %s66 = sadd.s32 %s65, 1
    %s67 = scalar_select %p64, %s65, %s66
    %p70 = pneg %p64
    %p71 = scmp.eq.s32.totalorder %s8, 1
    %p72 = por %p70, %p71
    %p73 = scmp.ne.s32.totalorder %s65, %s68
    %p74 = scmp.eq.s32.totalorder %s8, 0
    %p75 = por %p73, %p74
    %p76 = scmp.ne.s32.totalorder %s65, %s68
    %p77 = scmp.eq.s32.totalorder %s13, 1
    %p78 = por %p76, %p77
    %p79 = scmp.ne.s32.totalorder %s68, %s69
    %p80 = scmp.eq.s32.totalorder %s13, 0
    %p81 = por %p79, %p80
    %p82 = scmp.ne.s32.totalorder %s68, %s69
    %p83 = scmp.eq.s32.totalorder %s14, 1
    %p84 = por %p82, %p83
    %p86 = scmp.ne.s32.totalorder %s69, %s85
    %p87 = scmp.eq.s32.totalorder %s14, 0
    %p88 = por %p86, %p87
    %p89 = scmp.le.s32.totalorder 1, %s8
    %p90 = scmp.lt.s32.totalorder %s8, 3
    %p91 = pnand %p89, %p90
    %p92 = pneg %p91
    // Predicated region
    $region9: #{gaussian2d_anisotropic_forward.1} parent=5 // pred_check
      _
    $region10: #{gaussian2d_anisotropic_forward.1} parent=5 // pred_check_branch
      %94 = sbr.rel (%p91) target = $region12
    $region11: #{gaussian2d_anisotropic_forward.1} parent=5 // pred_region
      %s95 = ssub.s32 %s8, 1
      // Predicated region
      $region13: #{gaussian2d_anisotropic_forward.1} parent=11 // pred_check
        %p96 = pneg %p55
      $region14: #{gaussian2d_anisotropic_forward.1} parent=11 // pred_check_branch
        %98 = sbr.rel (%p96) target = $region16
      $region15: #{gaussian2d_anisotropic_forward.1} parent=11 // pred_region
        _
      $region16: #{gaussian2d_anisotropic_forward.1} parent=11 // pred_fallthru
        _
    $region12: #{gaussian2d_anisotropic_forward.1} parent=5 // pred_fallthru
      _
    %p99 = scmp.lt.s32.totalorder %s8, 2
    // Predicated region
    $region17: #{gaussian2d_anisotropic_forward.1} parent=5 // pred_check
      %p100 = pneg %p99
    $region18: #{gaussian2d_anisotropic_forward.1} parent=5 // pred_check_branch
      %102 = sbr.rel (%p100) target = $region20
    $region19: #{gaussian2d_anisotropic_forward.1} parent=5 // pred_region
      // Predicated region
      $region21: #{gaussian2d_anisotropic_forward.1} parent=19 // pred_check
        %p103 = pneg %p28
      $region22: #{gaussian2d_anisotropic_forward.1} parent=19 // pred_check_branch
        %105 = sbr.rel (%p103) target = $region24
      $region23: #{gaussian2d_anisotropic_forward.1} parent=19 // pred_region
        %p106 = scmp.lt.s32.totalorder %s8, 1
        %s107 = scalar_select %p106, %s8, 1
        %s108 = smul.addr %s107, 2
        %s109 = smul.addr %s108, 4
        %s110 = scalar_lea.vmem %s0, %s109
      $region24: #{gaussian2d_anisotropic_forward.1} parent=19 // pred_fallthru
        _
    $region20: #{gaussian2d_anisotropic_forward.1} parent=5 // pred_fallthru
      _
    %p111 = scmp.le.s32.totalorder 1, %s8
    %p112 = scmp.lt.s32.totalorder %s8, 3
    %p113 = pnand %p111, %p112
    %p114 = pneg %p113
    // Predicated region
    $region25: #{gaussian2d_anisotropic_forward.1} parent=5 // pred_check
      _
    $region26: #{gaussian2d_anisotropic_forward.1} parent=5 // pred_check_branch
      %116 = sbr.rel (%p113) target = $region28
    $region27: #{gaussian2d_anisotropic_forward.1} parent=5 // pred_region
      %s117 = ssub.s32 %s8, 1
      %p118 = scmp.lt.s32.totalorder %s13, 1
      %s119 = scalar_select %p118, %s13, 1
      %s120 = smul.addr %s119, 2
      %s121 = smul.addr %s120, 4
      %s122 = scalar_lea.vmem %s0, %s121
      %p123 = pneg %p34
      %p124 = pneg %p31
      %p125 = pneg %p55
      %p126 = pneg %p52
      %p127 = pneg %p81
      %p128 = pneg %p78
      %p129 = scmp.lt.s32.totalorder %s13, 1
      %s130 = scalar_select %p129, %s13, 1
      %s131 = smul.addr %s130, 2
      %s132 = smul.addr %s131, 8
      %s133 = scalar_lea.vmem %s2, %s132
      %p134 = scmp.lt.s32.totalorder %s13, 1
      %s135 = scalar_select %p134, %s13, 1
      %s136 = smul.addr %s135, 2
      %s137 = smul.addr %s136, 4
      %s138 = scalar_lea.vmem %s0, %s137
      %p139 = scmp.lt.s32.totalorder %s13, 1
      %s140 = scalar_select %p139, %s13, 1
      %s141 = smul.addr %s140, 2
      %s142 = smul.addr %s141, 8
      %s143 = scalar_lea.vmem %s2, %s142
      %v144 = vld [vmem:[%s138] sm:$0xff]
      %v145 = vld [vmem:[%s1] sm:$0xff]
      %v147 = vlaneseq
      %v148 = vshrl.u32 %v147, 7
      %v149 = vsub.s32 0, %v148
      %v150 = vrot.slane %v144, %v149
      %v151 = vlaneseq
      %v152 = vshrl.u32 %v151, 7
      %v153 = vsub.s32 4, %v152
      %v154 = vrot.slane %v144, %v153
      %v157 = vlaneseq
      %v158 = vshrl.u32 %v157, 7
      %v159 = vsub.s32 1, %v158
      %v160 = vrot.slane %v144, %v159
      %v161 = vlaneseq
      %v162 = vshrl.u32 %v161, 7
      %v163 = vsub.s32 5, %v162
      %v164 = vrot.slane %v144, %v163
      %v167 = vlaneseq
      %v168 = vshrl.u32 %v167, 7
      %v169 = vsub.s32 2, %v168
      %v170 = vrot.slane %v144, %v169
      %v171 = vlaneseq
      %v172 = vshrl.u32 %v171, 7
      %v173 = vsub.s32 6, %v172
      %v174 = vrot.slane %v144, %v173
      %v177 = vlaneseq
      %v178 = vshrl.u32 %v177, 7
      %v179 = vsub.s32 3, %v178
      %v180 = vrot.slane %v144, %v179
      %v181 = vlaneseq
      %v182 = vshrl.u32 %v181, 7
      %v183 = vsub.s32 7, %v182
      %v184 = vrot.slane %v144, %v183
      %vm187 = vcmask 1041408
      %v188 = vsel %vm187, %v150, %v160
      %v189 = vsel %vm187, %v154, %v164
      %vm190 = vcmask 1042432
      %v191 = vsel %vm190, %v188, %v160
      %v192 = vsel %vm190, %v189, %v164
      %vm193 = vcmask 1043456
      %v194 = vsel %vm193, %v191, %v170
      %v195 = vsel %vm193, %v192, %v174
      %vm196 = vcmask 1044480
      %v197 = vsel %vm196, %v194, %v170
      %v198 = vsel %vm196, %v195, %v174
      %vm199 = vcmask 1045504
      %v200 = vsel %vm199, %v197, %v180
      %v201 = vsel %vm199, %v198, %v184
      %vm202 = vcmask 1046528
      %v203 = vsel %vm202, %v200, %v180
      %v204 = vsel %vm202, %v201, %v184
      %207 = vrot.lane.b32.xlu0 %v203, 34
      %v208 = vpop.permute.xlu0 %207
      %209 = vrot.lane.b32.xlu0 %v204, 34
      %v210 = vpop.permute.xlu0 %209
      %vm211 = vcmask 277504
      %v212 = vsel %vm211, %v208, %v210
      %v216 = vsel %vm211, 0.0, %v208
      %v217 = vsel %vm211, %v210, 0.0
      %v218 = vlaneseq
      %v219 = vand.u32 %v218, 127
      %v220 = vadd.s32 %v219, 128
      %vm221 = vcmp.lt.s32.totalorder %v219, 0
      %v222 = vsub.s32 0, %v219
      %v223 = vsel %vm221, %v222, %v219
      %v224 = vshrl.u32 %v223, 4
      %v225 = vand.u32 %v223, 15
      %v226 = vsub.s32 0, %v225
      %v227 = vsel %vm221, %v226, %v225
      %vm228 = vcmp.lt.s32.totalorder %v220, 0
      %v229 = vsub.s32 0, %v220
      %v230 = vsel %vm228, %v229, %v220
      %v231 = vshrl.u32 %v230, 4
      %v232 = vand.u32 %v230, 15
      %v233 = vsub.s32 0, %v232
      %v234 = vsel %vm228, %v233, %v232
      %vm235 = vcmp.ne.s32.totalorder %v227, 0
      %vm236 = vcmp.ne.s32.totalorder %v234, 0
      %vm237 = vcmp.lt.s32.totalorder %v227, 0
      %vm238 = vcmp.lt.s32.totalorder %v234, 0
      %vm239 = vmand %vm237, %vm235
      %vm240 = vmand %vm238, %vm236
      %v241 = vadd.s32 %v227, 16
      %v242 = vadd.s32 %v234, 16
      %v243 = vsel %vm239, %v241, %v227
      %v244 = vsel %vm240, %v242, %v234
      %v245 = vadd.s32 %v243, 4294967294
      %v246 = vadd.s32 %v244, 4294967294
      %vm247 = vcmp.ge.s32.totalorder %v245, 0
      %vm248 = vcmp.ge.s32.totalorder %v246, 0
      %vm249 = vcmp.lt.s32.totalorder %v245, 16
      %vm250 = vcmp.lt.s32.totalorder %v246, 16
      %vm251 = vmand %vm247, %vm249
      %vm252 = vmand %vm248, %vm250
      %v253 = vadd.s32 %v243, 4294967295
      %v254 = vadd.s32 %v244, 4294967295
      %vm255 = vcmp.ge.s32.totalorder %v253, 0
      %vm256 = vcmp.ge.s32.totalorder %v254, 0
      %vm257 = vcmp.lt.s32.totalorder %v253, 16
      %vm258 = vcmp.lt.s32.totalorder %v254, 16
      %vm259 = vmand %vm255, %vm257
      %vm260 = vmand %vm256, %vm258
      %vm261 = vcmp.ge.s32.totalorder %v243, 0
      %vm262 = vcmp.ge.s32.totalorder %v244, 0
      %vm263 = vcmp.lt.s32.totalorder %v243, 16
      %vm264 = vcmp.lt.s32.totalorder %v244, 16
      %vm265 = vmand %vm261, %vm263
      %vm266 = vmand %vm262, %vm264
      %v267 = vadd.s32 %v243, 1
      %v268 = vadd.s32 %v244, 1
      %vm269 = vcmp.ge.s32.totalorder %v267, 0
      %vm270 = vcmp.ge.s32.totalorder %v268, 0
      %vm271 = vcmp.lt.s32.totalorder %v267, 16
      %vm272 = vcmp.lt.s32.totalorder %v268, 16
      %vm273 = vmand %vm269, %vm271
      %vm274 = vmand %vm270, %vm272
      %v275 = vadd.s32 %v243, 2
      %v276 = vadd.s32 %v244, 2
      %vm277 = vcmp.ge.s32.totalorder %v275, 0
      %vm278 = vcmp.ge.s32.totalorder %v276, 0
      %vm279 = vcmp.lt.s32.totalorder %v275, 16
      %vm280 = vcmp.lt.s32.totalorder %v276, 16
      %vm281 = vmand %vm277, %vm279
      %vm282 = vmand %vm278, %vm280
      %v283 = vsel %vm251, 1, 0
      %v284 = vsel %vm252, 1, 0
      %vm285 = vcmp.eq.s32.totalorder %v283, 1
      %vm286 = vcmp.eq.s32.totalorder %v284, 1
      %v287 = vsel %vm285, %v216, 0.0
      %v288 = vsel %vm286, %v212, 0.0
      %290 = vset.pattern.permute.xlu0 0
      %291 = vperm.xlu0 %290, %v145
      %v292 = vpop.permute.xlu0 %291
      %v294 = vmul.f32 %v287, %v292
      %v295 = vmul.f32 %v288, %v292
      %v296 = vadd.f32 %v294, 0.0
      %v297 = vadd.f32 %v295, 0.0
      %v298 = vsel %vm259, 1, 0
      %v299 = vsel %vm260, 1, 0
      %vm300 = vcmp.eq.s32.totalorder %v298, 1
      %vm301 = vcmp.eq.s32.totalorder %v299, 1
      %304 = vrot.lane.b32.xlu0 %v216, 127
      %v305 = vpop.permute.xlu0 %304
      %306 = vrot.lane.b32.xlu0 %v212, 127
      %v307 = vpop.permute.xlu0 %306
      %308 = vrot.lane.b32.xlu0 %v217, 127
      %v309 = vpop.permute.xlu0 %308
      %vm310 = vcmask 1039360
      %v311 = vsel %vm310, %v305, %v307
      %v312 = vsel %vm310, %v307, %v309
      %v315 = vsel %vm300, %v311, 0.0
      %v316 = vsel %vm301, %v312, 0.0
      %317 = vset.pattern.permute.xlu0 1
      %318 = vperm.xlu0 %317, %v145
      %v319 = vpop.permute.xlu0 %318
      %v321 = vmul.f32 %v315, %v319
      %v322 = vmul.f32 %v316, %v319
      %v323 = vadd.f32 %v296, %v321
      %v324 = vadd.f32 %v297, %v322
      %v325 = vsel %vm265, 1, 0
      %v326 = vsel %vm266, 1, 0
      %vm327 = vcmp.eq.s32.totalorder %v325, 1
      %vm328 = vcmp.eq.s32.totalorder %v326, 1
      %329 = vrot.lane.b32.xlu0 %v216, 126
      %v330 = vpop.permute.xlu0 %329
      %331 = vrot.lane.b32.xlu0 %v212, 126
      %v332 = vpop.permute.xlu0 %331
      %333 = vrot.lane.b32.xlu0 %v217, 126
      %v334 = vpop.permute.xlu0 %333
      %vm335 = vcmask 1031168
      %v336 = vsel %vm335, %v330, %v332
      %v337 = vsel %vm335, %v332, %v334
      %v340 = vsel %vm327, %v336, 0.0
      %v341 = vsel %vm328, %v337, 0.0
      %342 = vset.pattern.permute.xlu0 2
      %343 = vperm.xlu0 %342, %v145
      %v344 = vpop.permute.xlu0 %343
      %v346 = vmul.f32 %v340, %v344
      %v347 = vmul.f32 %v341, %v344
      %v348 = vadd.f32 %v323, %v346
      %v349 = vadd.f32 %v324, %v347
      %v350 = vsel %vm273, 1, 0
      %v351 = vsel %vm274, 1, 0
      %vm352 = vcmp.eq.s32.totalorder %v350, 1
      %vm353 = vcmp.eq.s32.totalorder %v351, 1
      %354 = vrot.lane.b32.xlu0 %v216, 125
      %v355 = vpop.permute.xlu0 %354
      %356 = vrot.lane.b32.xlu0 %v212, 125
      %v357 = vpop.permute.xlu0 %356
      %358 = vrot.lane.b32.xlu0 %v217, 125
      %v359 = vpop.permute.xlu0 %358
      %vm360 = vcmask 1022976
      %v361 = vsel %vm360, %v355, %v357
      %v362 = vsel %vm360, %v357, %v359
      %v365 = vsel %vm352, %v361, 0.0
      %v366 = vsel %vm353, %v362, 0.0
      %367 = vset.pattern.permute.xlu0 3
      %368 = vperm.xlu0 %367, %v145
      %v369 = vpop.permute.xlu0 %368
      %v371 = vmul.f32 %v365, %v369
      %v372 = vmul.f32 %v366, %v369
      %v373 = vadd.f32 %v348, %v371
      %v374 = vadd.f32 %v349, %v372
      %v375 = vsel %vm281, 1, 0
      %v376 = vsel %vm282, 1, 0
      %vm377 = vcmp.eq.s32.totalorder %v375, 1
      %vm378 = vcmp.eq.s32.totalorder %v376, 1
      %379 = vrot.lane.b32.xlu0 %v216, 124
      %v380 = vpop.permute.xlu0 %379
      %381 = vrot.lane.b32.xlu0 %v212, 124
      %v382 = vpop.permute.xlu0 %381
      %383 = vrot.lane.b32.xlu0 %v217, 124
      %v384 = vpop.permute.xlu0 %383
      %vm385 = vcmask 1014784
      %v386 = vsel %vm385, %v380, %v382
      %v387 = vsel %vm385, %v382, %v384
      %v390 = vsel %vm377, %v386, 0.0
      %v391 = vsel %vm378, %v387, 0.0
      %392 = vset.pattern.permute.xlu0 4
      %393 = vperm.xlu0 %392, %v145
      %v394 = vpop.permute.xlu0 %393
      %v396 = vmul.f32 %v390, %v394
      %v397 = vmul.f32 %v391, %v394
      %v398 = vadd.f32 %v373, %v396
      %v399 = vadd.f32 %v374, %v397
      %400 = vrot.lane.b32.xlu0 %v216, 112
      %v401 = vpop.permute.xlu0 %400
      %402 = vrot.lane.b32.xlu0 %v212, 112
      %v403 = vpop.permute.xlu0 %402
      %404 = vrot.lane.b32.xlu0 %v217, 112
      %v405 = vpop.permute.xlu0 %404
      %vm406 = vcmask 916480
      %v407 = vsel %vm406, %v401, %v403
      %v408 = vsel %vm406, %v403, %v405
      %v411 = vsel %vm285, %v407, 0.0
      %v412 = vsel %vm286, %v408, 0.0
      %413 = vset.pattern.permute.xlu0 5
      %414 = vperm.xlu0 %413, %v145
      %v415 = vpop.permute.xlu0 %414
      %v417 = vmul.f32 %v411, %v415
      %v418 = vmul.f32 %v412, %v415
      %v419 = vadd.f32 %v398, %v417
      %v420 = vadd.f32 %v399, %v418
      %421 = vrot.lane.b32.xlu0 %v216, 111
      %v422 = vpop.permute.xlu0 %421
      %423 = vrot.lane.b32.xlu0 %v212, 111
      %v424 = vpop.permute.xlu0 %423
      %425 = vrot.lane.b32.xlu0 %v217, 111
      %v426 = vpop.permute.xlu0 %425
      %vm427 = vcmask 908288
      %v428 = vsel %vm427, %v422, %v424
      %v429 = vsel %vm427, %v424, %v426
      %v432 = vsel %vm300, %v428, 0.0
      %v433 = vsel %vm301, %v429, 0.0
      %434 = vset.pattern.permute.xlu0 6
      %435 = vperm.xlu0 %434, %v145
      %v436 = vpop.permute.xlu0 %435
      %v438 = vmul.f32 %v432, %v436
      %v439 = vmul.f32 %v433, %v436
      %v440 = vadd.f32 %v419, %v438
      %v441 = vadd.f32 %v420, %v439
      %442 = vrot.lane.b32.xlu0 %v216, 110
      %v443 = vpop.permute.xlu0 %442
      %444 = vrot.lane.b32.xlu0 %v212, 110
      %v445 = vpop.permute.xlu0 %444
      %446 = vrot.lane.b32.xlu0 %v217, 110
      %v447 = vpop.permute.xlu0 %446
      %vm448 = vcmask 900096
      %v449 = vsel %vm448, %v443, %v445
      %v450 = vsel %vm448, %v445, %v447
      %v453 = vsel %vm327, %v449, 0.0
      %v454 = vsel %vm328, %v450, 0.0
      %455 = vset.pattern.permute.xlu0 7
      %456 = vperm.xlu0 %455, %v145
      %v457 = vpop.permute.xlu0 %456
      %v459 = vmul.f32 %v453, %v457
      %v460 = vmul.f32 %v454, %v457
      %v461 = vadd.f32 %v440, %v459
      %v462 = vadd.f32 %v441, %v460
      %463 = vrot.lane.b32.xlu0 %v216, 109
      %v464 = vpop.permute.xlu0 %463
      %465 = vrot.lane.b32.xlu0 %v212, 109
      %v466 = vpop.permute.xlu0 %465
      %467 = vrot.lane.b32.xlu0 %v217, 109
      %v468 = vpop.permute.xlu0 %467
      %vm469 = vcmask 891904
      %v470 = vsel %vm469, %v464, %v466
      %v471 = vsel %vm469, %v466, %v468
      %v474 = vsel %vm352, %v470, 0.0
      %v475 = vsel %vm353, %v471, 0.0
      %476 = vset.pattern.permute.xlu0 8
      %477 = vperm.xlu0 %476, %v145
      %v478 = vpop.permute.xlu0 %477
      %v480 = vmul.f32 %v474, %v478
      %v481 = vmul.f32 %v475, %v478
      %v482 = vadd.f32 %v461, %v480
      %v483 = vadd.f32 %v462, %v481
      %484 = vrot.lane.b32.xlu0 %v216, 108
      %v485 = vpop.permute.xlu0 %484
      %486 = vrot.lane.b32.xlu0 %v212, 108
      %v487 = vpop.permute.xlu0 %486
      %488 = vrot.lane.b32.xlu0 %v217, 108
      %v489 = vpop.permute.xlu0 %488
      %vm490 = vcmask 883712
      %v491 = vsel %vm490, %v485, %v487
      %v492 = vsel %vm490, %v487, %v489
      %v495 = vsel %vm377, %v491, 0.0
      %v496 = vsel %vm378, %v492, 0.0
      %497 = vset.pattern.permute.xlu0 9
      %498 = vperm.xlu0 %497, %v145
      %v499 = vpop.permute.xlu0 %498
      %v501 = vmul.f32 %v495, %v499
      %v502 = vmul.f32 %v496, %v499
      %v503 = vadd.f32 %v482, %v501
      %v504 = vadd.f32 %v483, %v502
      %505 = vrot.lane.b32.xlu0 %v216, 96
      %v506 = vpop.permute.xlu0 %505
      %507 = vrot.lane.b32.xlu0 %v212, 96
      %v508 = vpop.permute.xlu0 %507
      %509 = vrot.lane.b32.xlu0 %v217, 96
      %v510 = vpop.permute.xlu0 %509
      %vm511 = vcmask 785408
      %v512 = vsel %vm511, %v506, %v508
      %v513 = vsel %vm511, %v508, %v510
      %v516 = vsel %vm285, %v512, 0.0
      %v517 = vsel %vm286, %v513, 0.0
      %518 = vset.pattern.permute.xlu0 10
      %519 = vperm.xlu0 %518, %v145
      %v520 = vpop.permute.xlu0 %519
      %v522 = vmul.f32 %v516, %v520
      %v523 = vmul.f32 %v517, %v520
      %v524 = vadd.f32 %v503, %v522
      %v525 = vadd.f32 %v504, %v523
      %526 = vrot.lane.b32.xlu0 %v216, 95
      %v527 = vpop.permute.xlu0 %526
      %528 = vrot.lane.b32.xlu0 %v212, 95
      %v529 = vpop.permute.xlu0 %528
      %530 = vrot.lane.b32.xlu0 %v217, 95
      %v531 = vpop.permute.xlu0 %530
      %vm532 = vcmask 777216
      %v533 = vsel %vm532, %v527, %v529
      %v534 = vsel %vm532, %v529, %v531
      %v537 = vsel %vm300, %v533, 0.0
      %v538 = vsel %vm301, %v534, 0.0
      %539 = vset.pattern.permute.xlu0 11
      %540 = vperm.xlu0 %539, %v145
      %v541 = vpop.permute.xlu0 %540
      %v543 = vmul.f32 %v537, %v541
      %v544 = vmul.f32 %v538, %v541
      %v545 = vadd.f32 %v524, %v543
      %v546 = vadd.f32 %v525, %v544
      %547 = vrot.lane.b32.xlu0 %v216, 94
      %v548 = vpop.permute.xlu0 %547
      %549 = vrot.lane.b32.xlu0 %v212, 94
      %v550 = vpop.permute.xlu0 %549
      %551 = vrot.lane.b32.xlu0 %v217, 94
      %v552 = vpop.permute.xlu0 %551
      %vm553 = vcmask 769024
      %v554 = vsel %vm553, %v548, %v550
      %v555 = vsel %vm553, %v550, %v552
      %v558 = vsel %vm327, %v554, 0.0
      %v559 = vsel %vm328, %v555, 0.0
      %560 = vset.pattern.permute.xlu0 12
      %561 = vperm.xlu0 %560, %v145
      %v562 = vpop.permute.xlu0 %561
      %v564 = vmul.f32 %v558, %v562
      %v565 = vmul.f32 %v559, %v562
      %v566 = vadd.f32 %v545, %v564
      %v567 = vadd.f32 %v546, %v565
      %568 = vrot.lane.b32.xlu0 %v216, 93
      %v569 = vpop.permute.xlu0 %568
      %570 = vrot.lane.b32.xlu0 %v212, 93
      %v571 = vpop.permute.xlu0 %570
      %572 = vrot.lane.b32.xlu0 %v217, 93
      %v573 = vpop.permute.xlu0 %572
      %vm574 = vcmask 760832
      %v575 = vsel %vm574, %v569, %v571
      %v576 = vsel %vm574, %v571, %v573
      %v579 = vsel %vm352, %v575, 0.0
      %v580 = vsel %vm353, %v576, 0.0
      %581 = vset.pattern.permute.xlu0 13
      %582 = vperm.xlu0 %581, %v145
      %v583 = vpop.permute.xlu0 %582
      %v585 = vmul.f32 %v579, %v583
      %v586 = vmul.f32 %v580, %v583
      %v587 = vadd.f32 %v566, %v585
      %v588 = vadd.f32 %v567, %v586
      %589 = vrot.lane.b32.xlu0 %v216, 92
      %v590 = vpop.permute.xlu0 %589
      %591 = vrot.lane.b32.xlu0 %v212, 92
      %v592 = vpop.permute.xlu0 %591
      %593 = vrot.lane.b32.xlu0 %v217, 92
      %v594 = vpop.permute.xlu0 %593
      %vm595 = vcmask 752640
      %v596 = vsel %vm595, %v590, %v592
      %v597 = vsel %vm595, %v592, %v594
      %v600 = vsel %vm377, %v596, 0.0
      %v601 = vsel %vm378, %v597, 0.0
      %602 = vset.pattern.permute.xlu0 14
      %603 = vperm.xlu0 %602, %v145
      %v604 = vpop.permute.xlu0 %603
      %v606 = vmul.f32 %v600, %v604
      %v607 = vmul.f32 %v601, %v604
      %v608 = vadd.f32 %v587, %v606
      %v609 = vadd.f32 %v588, %v607
      %610 = vrot.lane.b32.xlu0 %v216, 80
      %v611 = vpop.permute.xlu0 %610
      %612 = vrot.lane.b32.xlu0 %v212, 80
      %v613 = vpop.permute.xlu0 %612
      %614 = vrot.lane.b32.xlu0 %v217, 80
      %v615 = vpop.permute.xlu0 %614
      %vm616 = vcmask 654336
      %v617 = vsel %vm616, %v611, %v613
      %v618 = vsel %vm616, %v613, %v615
      %v621 = vsel %vm285, %v617, 0.0
      %v622 = vsel %vm286, %v618, 0.0
      %623 = vset.pattern.permute.xlu0 15
      %624 = vperm.xlu0 %623, %v145
      %v625 = vpop.permute.xlu0 %624
      %v627 = vmul.f32 %v621, %v625
      %v628 = vmul.f32 %v622, %v625
      %v629 = vadd.f32 %v608, %v627
      %v630 = vadd.f32 %v609, %v628
      %631 = vrot.lane.b32.xlu0 %v216, 79
      %v632 = vpop.permute.xlu0 %631
      %633 = vrot.lane.b32.xlu0 %v212, 79
      %v634 = vpop.permute.xlu0 %633
      %635 = vrot.lane.b32.xlu0 %v217, 79
      %v636 = vpop.permute.xlu0 %635
      %vm637 = vcmask 646144
      %v638 = vsel %vm637, %v632, %v634
      %v639 = vsel %vm637, %v634, %v636
      %v642 = vsel %vm300, %v638, 0.0
      %v643 = vsel %vm301, %v639, 0.0
      %644 = vset.pattern.permute.xlu0 16
      %645 = vperm.xlu0 %644, %v145
      %v646 = vpop.permute.xlu0 %645
      %v648 = vmul.f32 %v642, %v646
      %v649 = vmul.f32 %v643, %v646
      %v650 = vadd.f32 %v629, %v648
      %v651 = vadd.f32 %v630, %v649
      %652 = vrot.lane.b32.xlu0 %v216, 78
      %v653 = vpop.permute.xlu0 %652
      %654 = vrot.lane.b32.xlu0 %v212, 78
      %v655 = vpop.permute.xlu0 %654
      %656 = vrot.lane.b32.xlu0 %v217, 78
      %v657 = vpop.permute.xlu0 %656
      %vm658 = vcmask 637952
      %v659 = vsel %vm658, %v653, %v655
      %v660 = vsel %vm658, %v655, %v657
      %v663 = vsel %vm327, %v659, 0.0
      %v664 = vsel %vm328, %v660, 0.0
      %665 = vset.pattern.permute.xlu0 17
      %666 = vperm.xlu0 %665, %v145
      %v667 = vpop.permute.xlu0 %666
      %v669 = vmul.f32 %v663, %v667
      %v670 = vmul.f32 %v664, %v667
      %v671 = vadd.f32 %v650, %v669
      %v672 = vadd.f32 %v651, %v670
      %673 = vrot.lane.b32.xlu0 %v216, 77
      %v674 = vpop.permute.xlu0 %673
      %675 = vrot.lane.b32.xlu0 %v212, 77
      %v676 = vpop.permute.xlu0 %675
      %677 = vrot.lane.b32.xlu0 %v217, 77
      %v678 = vpop.permute.xlu0 %677
      %vm679 = vcmask 629760
      %v680 = vsel %vm679, %v674, %v676
      %v681 = vsel %vm679, %v676, %v678
      %v684 = vsel %vm352, %v680, 0.0
      %v685 = vsel %vm353, %v681, 0.0
      %686 = vset.pattern.permute.xlu0 18
      %687 = vperm.xlu0 %686, %v145
      %v688 = vpop.permute.xlu0 %687
      %v690 = vmul.f32 %v684, %v688
      %v691 = vmul.f32 %v685, %v688
      %v692 = vadd.f32 %v671, %v690
      %v693 = vadd.f32 %v672, %v691
      %694 = vrot.lane.b32.xlu0 %v216, 76
      %v695 = vpop.permute.xlu0 %694
      %696 = vrot.lane.b32.xlu0 %v212, 76
      %v697 = vpop.permute.xlu0 %696
      %698 = vrot.lane.b32.xlu0 %v217, 76
      %v699 = vpop.permute.xlu0 %698
      %vm700 = vcmask 621568
      %v701 = vsel %vm700, %v695, %v697
      %v702 = vsel %vm700, %v697, %v699
      %v705 = vsel %vm377, %v701, 0.0
      %v706 = vsel %vm378, %v702, 0.0
      %707 = vset.pattern.permute.xlu0 19
      %708 = vperm.xlu0 %707, %v145
      %v709 = vpop.permute.xlu0 %708
      %v711 = vmul.f32 %v705, %v709
      %v712 = vmul.f32 %v706, %v709
      %v713 = vadd.f32 %v692, %v711
      %v714 = vadd.f32 %v693, %v712
      %715 = vrot.lane.b32.xlu0 %v216, 64
      %v716 = vpop.permute.xlu0 %715
      %717 = vrot.lane.b32.xlu0 %v212, 64
      %v718 = vpop.permute.xlu0 %717
      %719 = vrot.lane.b32.xlu0 %v217, 64
      %v720 = vpop.permute.xlu0 %719
      %vm721 = vcmask 523264
      %v722 = vsel %vm721, %v716, %v718
      %v723 = vsel %vm721, %v718, %v720
      %v726 = vsel %vm285, %v722, 0.0
      %v727 = vsel %vm286, %v723, 0.0
      %728 = vset.pattern.permute.xlu0 20
      %729 = vperm.xlu0 %728, %v145
      %v730 = vpop.permute.xlu0 %729
      %v732 = vmul.f32 %v726, %v730
      %v733 = vmul.f32 %v727, %v730
      %v734 = vadd.f32 %v713, %v732
      %v735 = vadd.f32 %v714, %v733
      %736 = vrot.lane.b32.xlu0 %v216, 63
      %v737 = vpop.permute.xlu0 %736
      %738 = vrot.lane.b32.xlu0 %v212, 63
      %v739 = vpop.permute.xlu0 %738
      %740 = vrot.lane.b32.xlu0 %v217, 63
      %v741 = vpop.permute.xlu0 %740
      %vm742 = vcmask 515072
      %v743 = vsel %vm742, %v737, %v739
      %v744 = vsel %vm742, %v739, %v741
      %v747 = vsel %vm300, %v743, 0.0
      %v748 = vsel %vm301, %v744, 0.0
      %749 = vset.pattern.permute.xlu0 21
      %750 = vperm.xlu0 %749, %v145
      %v751 = vpop.permute.xlu0 %750
      %v753 = vmul.f32 %v747, %v751
      %v754 = vmul.f32 %v748, %v751
      %v755 = vadd.f32 %v734, %v753
      %v756 = vadd.f32 %v735, %v754
      %757 = vrot.lane.b32.xlu0 %v216, 62
      %v758 = vpop.permute.xlu0 %757
      %759 = vrot.lane.b32.xlu0 %v212, 62
      %v760 = vpop.permute.xlu0 %759
      %761 = vrot.lane.b32.xlu0 %v217, 62
      %v762 = vpop.permute.xlu0 %761
      %vm763 = vcmask 506880
      %v764 = vsel %vm763, %v758, %v760
      %v765 = vsel %vm763, %v760, %v762
      %v768 = vsel %vm327, %v764, 0.0
      %v769 = vsel %vm328, %v765, 0.0
      %770 = vset.pattern.permute.xlu0 22
      %771 = vperm.xlu0 %770, %v145
      %v772 = vpop.permute.xlu0 %771
      %v774 = vmul.f32 %v768, %v772
      %v775 = vmul.f32 %v769, %v772
      %v776 = vadd.f32 %v755, %v774
      %v777 = vadd.f32 %v756, %v775
      %778 = vrot.lane.b32.xlu0 %v216, 61
      %v779 = vpop.permute.xlu0 %778
      %780 = vrot.lane.b32.xlu0 %v212, 61
      %v781 = vpop.permute.xlu0 %780
      %782 = vrot.lane.b32.xlu0 %v217, 61
      %v783 = vpop.permute.xlu0 %782
      %vm784 = vcmask 498688
      %v785 = vsel %vm784, %v779, %v781
      %v786 = vsel %vm784, %v781, %v783
      %v789 = vsel %vm352, %v785, 0.0
      %v790 = vsel %vm353, %v786, 0.0
      %791 = vset.pattern.permute.xlu0 23
      %792 = vperm.xlu0 %791, %v145
      %v793 = vpop.permute.xlu0 %792
      %v795 = vmul.f32 %v789, %v793
      %v796 = vmul.f32 %v790, %v793
      %v797 = vadd.f32 %v776, %v795
      %v798 = vadd.f32 %v777, %v796
      %799 = vrot.lane.b32.xlu0 %v216, 60
      %v800 = vpop.permute.xlu0 %799
      %801 = vrot.lane.b32.xlu0 %v212, 60
      %v802 = vpop.permute.xlu0 %801
      %803 = vrot.lane.b32.xlu0 %v217, 60
      %v804 = vpop.permute.xlu0 %803
      %vm805 = vcmask 490496
      %v806 = vsel %vm805, %v800, %v802
      %v807 = vsel %vm805, %v802, %v804
      %v810 = vsel %vm377, %v806, 0.0
      %v811 = vsel %vm378, %v807, 0.0
      %812 = vset.pattern.permute.xlu0 24
      %813 = vperm.xlu0 %812, %v145
      %v814 = vpop.permute.xlu0 %813
      %v816 = vmul.f32 %v810, %v814
      %v817 = vmul.f32 %v811, %v814
      %v818 = vadd.f32 %v797, %v816
      %v819 = vadd.f32 %v798, %v817
      %820 = vst [vmem:[%s143] sm:$0xff] %v818
      %821 = vst [vmem:[%s143 + $0x8] sm:$0xff] %v819
      %p822 = scmp.lt.s32.totalorder %s13, 1
      %s823 = scalar_select %p822, %s13, 1
      %s824 = smul.addr %s823, 2
      %s825 = smul.addr %s824, 8
      %s826 = scalar_lea.vmem %s2, %s825
      // Predicated region
      $region29: #{gaussian2d_anisotropic_forward.1} parent=27 // pred_check
        %p827 = pneg %p78
      $region30: #{gaussian2d_anisotropic_forward.1} parent=27 // pred_check_branch
        %829 = sbr.rel (%p827) target = $region32
      $region31: #{gaussian2d_anisotropic_forward.1} parent=27 // pred_region
        _
      $region32: #{gaussian2d_anisotropic_forward.1} parent=27 // pred_fallthru
        _
    $region28: #{gaussian2d_anisotropic_forward.1} parent=5 // pred_fallthru
      _
    %p830 = scmp.le.s32.totalorder 2, %s8
    // Predicated region
    $region33: #{gaussian2d_anisotropic_forward.1} parent=5 // pred_check
      %p831 = pneg %p830
    $region34: #{gaussian2d_anisotropic_forward.1} parent=5 // pred_check_branch
      %833 = sbr.rel (%p831) target = $region36
    $region35: #{gaussian2d_anisotropic_forward.1} parent=5 // pred_region
      %s834 = ssub.s32 %s8, 2
      // Predicated region
      $region37: #{gaussian2d_anisotropic_forward.1} parent=35 // pred_check
        %p835 = pneg %p84
      $region38: #{gaussian2d_anisotropic_forward.1} parent=35 // pred_check_branch
        %837 = sbr.rel (%p835) target = $region40
      $region39: #{gaussian2d_anisotropic_forward.1} parent=35 // pred_region
        %p838 = scmp.lt.s32.totalorder %s14, 1
        %s839 = scalar_select %p838, %s14, 1
        %s840 = smul.addr %s839, 2
        %s841 = smul.addr %s840, 8
        %s842 = scalar_lea.vmem %s2, %s841
      $region40: #{gaussian2d_anisotropic_forward.1} parent=35 // pred_fallthru
        _
    $region36: #{gaussian2d_anisotropic_forward.1} parent=5 // pred_fallthru
      _
  $region6: #{gaussian2d_anisotropic_forward.1} parent=0 // loop_footer
    %s12 = sadd.s32 1, %s8
  $region7: #{gaussian2d_anisotropic_forward.1} parent=0 // loop_footer_branch
    %7 = sbr.rel target = $region3
  $region8: #{gaussian2d_anisotropic_forward.1} parent=0 // loop_exit
    _

</llo_original>
